<compile_context>
chip_gen: v7x
topology: tpu7x:2x2x1
jax: 0.10.0
libtpu: 0.0.40
codegen_flags: <defaults>
</compile_context>

<pallas_src>
import math
import numpy as np
import jax
import jax.numpy as jnp
from jax.experimental import pallas as pl
from jax.experimental.pallas import tpu as pltpu

LANE = 128            # lane-dense output / weight padding
W_ROWS = 160          # packed weight block rows (16-aligned section offsets)
T1_OFF, T2_OFF, T3_OFF, B_OFF = 0, 16, 80, 144


def gcn_kernel(a_ref, node_ref, poold_ref, w_ref, out_ref):
    """Fused 3-layer GCN forward.

    Per layer:  sym @ (h @ theta) == d ⊙ (A @ (d ⊙ (h @ theta)))
    Head:       pool @ sym @ (h2 @ theta3) @ W + b
                == ((pool ⊙ d_row) @ A) @ (d ⊙ (h2 @ (theta3 @ W))) + b
    bf16 MXU operands, f32 accumulation, f32 elementwise (scaling / ReLU / bias).
    """
    A = a_ref[...]                                        # (N, N) bf16, exact {0,1}
    d = node_ref[:, 0:1]                                  # (N, 1) f32, deg^{-1/2}
    x = node_ref[:, 1:9].astype(jnp.bfloat16)             # (N, 8)  (7 feats + zero pad)

    t1 = w_ref[T1_OFF:T1_OFF + 8, 0:64]                   # (8, 64)  bf16 (row 7 zero)
    t2 = w_ref[T2_OFF:T2_OFF + 64, 0:64]                  # (64, 64) bf16
    t3w = w_ref[T3_OFF:T3_OFF + 64, :]                    # (64, 128) bf16 (theta3 @ W)
    b = w_ref[B_OFF:B_OFF + 1, :].astype(jnp.float32)     # (1, 128)

    # GCNConv1 + ReLU
    h = jnp.dot(x, t1, preferred_element_type=jnp.float32)
    h = (d * h).astype(jnp.bfloat16)
    h = jnp.dot(A, h, preferred_element_type=jnp.float32)
    h = jnp.maximum(d * h, 0.0).astype(jnp.bfloat16)

    # GCNConv2 + ReLU
    h = jnp.dot(h, t2, preferred_element_type=jnp.float32)
    h = (d * h).astype(jnp.bfloat16)
    h = jnp.dot(A, h, preferred_element_type=jnp.float32)
    h = jnp.maximum(d * h, 0.0).astype(jnp.bfloat16)

    # GCNConv3 + global_mean_pool + Linear, algebraically folded.
    z = jnp.dot(h, t3w, preferred_element_type=jnp.float32)              # (N, 128)
    z = (d * z).astype(jnp.bfloat16)
    ps = jnp.dot(poold_ref[...], A, preferred_element_type=jnp.float32)  # (B, N)
    out_ref[...] = (
        jnp.dot(ps.astype(jnp.bfloat16), z, preferred_element_type=jnp.float32) + b
    )
    # Dropout(p=0.5) is identity in eval mode.
    # TODO(synk): training-mode dropout (pltpu.prng_* mask + 1/(1-p)) not implemented.


def _adjacency_and_deg(edge_index, n_nodes):
    # Mirrors the PyTorch code: A_hat = I; A_hat[src, dst] = 1; degree over dim=0.
    A = jnp.eye(n_nodes, dtype=jnp.bfloat16)
    A = A.at[edge_index[0], edge_index[1]].set(1.0)        # {0,1}: exact in bf16
    deg = jnp.sum(A, axis=0, dtype=jnp.float32)
    return A, deg ** (-0.5)


def _build_pool(batch, num_graphs):
    one_hot = (batch[None, :] == jnp.arange(num_graphs)[:, None]).astype(jnp.float32)
    return one_hot / jnp.sum(one_hot, axis=1, keepdims=True)


def _pack_weights(params):
    t3w = params["theta3"] @ params["lin_w_t"]             # (64, 2), folded head
    W = jnp.zeros((W_ROWS, LANE), jnp.float32)
    W = W.at[T1_OFF:T1_OFF + 7, 0:64].set(params["theta1"])
    W = W.at[T2_OFF:T2_OFF + 64, 0:64].set(params["theta2"])
    W = W.at[T3_OFF:T3_OFF + 64, 0:t3w.shape[1]].set(t3w)
    W = W.at[B_OFF, 0:params["lin_b"].shape[1]].set(params["lin_b"][0])
    return W.astype(jnp.bfloat16)


def gcn_forward(x, edge_index, batch, params, num_graphs):
    n_nodes = x.shape[0]
    A, d = _adjacency_and_deg(edge_index, n_nodes)
    pool = _build_pool(batch, num_graphs)

    # Fold the head's leading diag(d) into pool; the trailing diag(d) is applied
    # in-kernel on the z accumulator.
    pool_d = (pool * d[None, :]).astype(jnp.bfloat16)       # (B, N)

    # Coalesced node-side block: col 0 = d (f32), cols 1..7 = x, col 8 = zero pad.
    node = jnp.zeros((n_nodes, 9), jnp.float32)
    node = node.at[:, 0].set(d)
    node = node.at[:, 1:8].set(x.astype(jnp.float32))

    w_packed = _pack_weights(params)
    operands = (A, node, pool_d, w_packed)

    # VMEM budget from actual per-block residency (double-buffered inputs + output
    # + f32 temporaries), capped at 40 MiB (safe within v7x's 64 MiB physical VMEM).
    in_bytes = sum(int(np.prod(o.shape)) * o.dtype.itemsize for o in operands)
    out_bytes = num_graphs * LANE * 4
    temp_bytes = n_nodes * LANE * 4 * 4
    vmem_limit = int(min(40 * 2**20,
                         max(4 * 2**20,
                             2 * (in_bytes + out_bytes) + temp_bytes + (2 << 20))))

    flops = 2 * (n_nodes * 8 * 64                     # x @ theta1
                 + 2 * n_nodes * n_nodes * 64         # A @ h (layers 1-2)
                 + n_nodes * 64 * 64                  # h @ theta2
                 + n_nodes * 64 * LANE                # h @ (theta3 @ W)
                 + num_graphs * n_nodes * n_nodes     # (pool ⊙ d) @ A
                 + num_graphs * n_nodes * LANE)       # ps @ z
    cost = pl.CostEstimate(flops=flops, transcendentals=0,
                           bytes_accessed=in_bytes + out_bytes)

    out_pad = pl.pallas_call(
        gcn_kernel,
        out_shape=jax.ShapeDtypeStruct((num_graphs, LANE), jnp.float32),
        grid=(1,),
        in_specs=[pl.BlockSpec(op.shape, lambda i: (0, 0)) for op in operands],
        out_specs=pl.BlockSpec((num_graphs, LANE), lambda i: (0, 0)),
        compiler_params=pltpu.CompilerParams(
            dimension_semantics=("arbitrary",),
            vmem_limit_bytes=vmem_limit,
        ),
        cost_estimate=cost,
    )(*operands)
    return out_pad[:, :2]


def _ref_forward(x, edge_index, batch, params, num_graphs):
    # Pure-JAX f32 reference (unfused), matching the PyTorch module semantics.
    n = x.shape[0]
    A = jnp.eye(n, dtype=jnp.float32).at[edge_index[0], edge_index[1]].set(1.0)
    d = jnp.sum(A, axis=0) ** (-0.5)
    sym = d[:, None] * A * d[None, :]
    pool = _build_pool(batch, num_graphs)
    h = jnp.maximum(sym @ (x @ params["theta1"]), 0.0)
    h = jnp.maximum(sym @ (h @ params["theta2"]), 0.0)
    h = sym @ (h @ params["theta3"])
    g = pool @ h
    return g @ params["lin_w_t"] + params["lin_b"]


def init_params(key):
    k1, k2, k3, k4, k5 = jax.random.split(key, 5)
    stdv = 1.0 / math.sqrt(64.0)        # GCNConv: uniform(-1/sqrt(out_ch), 1/sqrt(out_ch))
    lin_bound = 1.0 / math.sqrt(64.0)   # nn.Linear default init bound
    return {
        "theta1": jax.random.uniform(k1, (7, 64), jnp.float32, -stdv, stdv),
        "theta2": jax.random.uniform(k2, (64, 64), jnp.float32, -stdv, stdv),
        "theta3": jax.random.uniform(k3, (64, 64), jnp.float32, -stdv, stdv),
        "lin_w_t": jax.random.uniform(k4, (64, 2), jnp.float32, -lin_bound, lin_bound),
        "lin_b": jax.random.uniform(k5, (1, 2), jnp.float32, -lin_bound, lin_bound),
    }


if __name__ == "__main__":
    key = jax.random.PRNGKey(0)
    pkey, xkey, ekey = jax.random.split(key, 3)

    num_nodes = 16
    num_edges = 24
    num_graphs = 2

    params = init_params(pkey)
    x = jax.random.normal(xkey, (num_nodes, 7), dtype=jnp.float32)
    edge_index = jax.random.randint(ekey, (2, num_edges), 0, num_nodes, dtype=jnp.int32)
    batch = jnp.concatenate(
        [jnp.zeros((8,), jnp.int32), jnp.ones((8,), jnp.int32)]
    )  # 2 graphs of 8 nodes each, processed in a single pallas_call

    out = gcn_forward(x, edge_index, batch, params, num_graphs)
    out = jax.block_until_ready(out)

    ref = _ref_forward(x, edge_index, batch, params, num_graphs)
    # bf16 matmul operands with f32 accumulation + algebraic refolding => loose tol.
    np.testing.assert_allclose(np.asarray(out), np.asarray(ref), rtol=5e-2, atol=5e-2)

    assert out.shape == (num_graphs, 2) and out.dtype == jnp.float32
    print("KERNEL_OK")
</pallas_src>

<mosaic_0001>
module attributes {stable_mosaic.version = 11 : i64} {
  func.func @gcn_kernel(%arg0: i32, %arg1: memref<16x16xbf16, #tpu.memory_space<vmem>>, %arg2: memref<16x9xf32, #tpu.memory_space<vmem>>, %arg3: memref<2x16xbf16, #tpu.memory_space<vmem>>, %arg4: memref<160x128xbf16, #tpu.memory_space<vmem>>, %arg5: memref<2x128xf32, #tpu.memory_space<vmem>>) attributes {dimension_semantics = [#tpu.dimension_semantics<arbitrary>], iteration_bounds = array<i64: 1>, scalar_prefetch = 0 : i64, scratch_operands = 0 : i64, tpu.core_type = #tpu.core_type<tc>, window_params = [{pipeline_mode = #tpu.pipeline_mode<synchronous>, transform_indices = @transform_0, window_bounds = array<i64: 16, 16>}, {pipeline_mode = #tpu.pipeline_mode<synchronous>, transform_indices = @transform_1, window_bounds = array<i64: 16, 9>}, {pipeline_mode = #tpu.pipeline_mode<synchronous>, transform_indices = @transform_2, window_bounds = array<i64: 2, 16>}, {pipeline_mode = #tpu.pipeline_mode<synchronous>, transform_indices = @transform_3, window_bounds = array<i64: 160, 128>}, {pipeline_mode = #tpu.pipeline_mode<synchronous>, transform_indices = @transform_4, window_bounds = array<i64: 2, 128>}]} {
    %c0 = arith.constant 0 : index
    %c0_0 = arith.constant 0 : index
    %0 = vector.load %arg1[%c0, %c0_0] : memref<16x16xbf16, #tpu.memory_space<vmem>>, vector<16x16xbf16>
    %c0_1 = arith.constant 0 : index
    %c0_2 = arith.constant 0 : index
    %1 = vector.load %arg2[%c0_1, %c0_2] : memref<16x9xf32, #tpu.memory_space<vmem>>, vector<16x1xf32>
    %c0_3 = arith.constant 0 : index
    %c1 = arith.constant 1 : index
    %2 = vector.load %arg2[%c0_3, %c1] : memref<16x9xf32, #tpu.memory_space<vmem>>, vector<16x8xf32>
    %3 = arith.truncf %2 : vector<16x8xf32> to vector<16x8xbf16>
    %c0_4 = arith.constant 0 : index
    %c0_5 = arith.constant 0 : index
    %4 = vector.load %arg4[%c0_4, %c0_5] : memref<160x128xbf16, #tpu.memory_space<vmem>>, vector<8x64xbf16>
    %c16 = arith.constant 16 : index
    %c0_6 = arith.constant 0 : index
    %5 = vector.load %arg4[%c16, %c0_6] : memref<160x128xbf16, #tpu.memory_space<vmem>>, vector<64x64xbf16>
    %c80 = arith.constant 80 : index
    %c0_7 = arith.constant 0 : index
    %6 = vector.load %arg4[%c80, %c0_7] : memref<160x128xbf16, #tpu.memory_space<vmem>>, vector<64x128xbf16>
    %c144 = arith.constant 144 : index
    %c0_8 = arith.constant 0 : index
    %7 = vector.load %arg4[%c144, %c0_8] : memref<160x128xbf16, #tpu.memory_space<vmem>>, vector<1x128xbf16>
    %8 = arith.extf %7 : vector<1x128xbf16> to vector<1x128xf32>
    %cst = arith.constant dense<0.000000e+00> : vector<16x64xf32>
    %9 = tpu.matmul %3, %4, %cst {dimension_numbers = #tpu.dot_dimension_numbers<[1], [0], [0], [1], [0, 0, 1, 1], [], []>} : vector<16x8xbf16>, vector<8x64xbf16>, vector<16x64xf32> -> vector<16x64xf32>
    %10 = vector.broadcast %1 : vector<16x1xf32> to vector<16x64xf32>
    %11 = arith.mulf %10, %9 : vector<16x64xf32>
    %12 = arith.truncf %11 : vector<16x64xf32> to vector<16x64xbf16>
    %cst_9 = arith.constant dense<0.000000e+00> : vector<16x64xf32>
    %13 = tpu.matmul %0, %12, %cst_9 {dimension_numbers = #tpu.dot_dimension_numbers<[1], [0], [0], [1], [0, 0, 1, 1], [], []>} : vector<16x16xbf16>, vector<16x64xbf16>, vector<16x64xf32> -> vector<16x64xf32>
    %14 = vector.broadcast %1 : vector<16x1xf32> to vector<16x64xf32>
    %15 = arith.mulf %14, %13 : vector<16x64xf32>
    %cst_10 = arith.constant 0.000000e+00 : f32
    %16 = vector.broadcast %cst_10 : f32 to vector<16x64xf32>
    %17 = arith.maximumf %15, %16 : vector<16x64xf32>
    %18 = arith.truncf %17 : vector<16x64xf32> to vector<16x64xbf16>
    %cst_11 = arith.constant dense<0.000000e+00> : vector<16x64xf32>
    %19 = tpu.matmul %18, %5, %cst_11 {dimension_numbers = #tpu.dot_dimension_numbers<[1], [0], [0], [1], [0, 0, 1, 1], [], []>} : vector<16x64xbf16>, vector<64x64xbf16>, vector<16x64xf32> -> vector<16x64xf32>
    %20 = vector.broadcast %1 : vector<16x1xf32> to vector<16x64xf32>
    %21 = arith.mulf %20, %19 : vector<16x64xf32>
    %22 = arith.truncf %21 : vector<16x64xf32> to vector<16x64xbf16>
    %cst_12 = arith.constant dense<0.000000e+00> : vector<16x64xf32>
    %23 = tpu.matmul %0, %22, %cst_12 {dimension_numbers = #tpu.dot_dimension_numbers<[1], [0], [0], [1], [0, 0, 1, 1], [], []>} : vector<16x16xbf16>, vector<16x64xbf16>, vector<16x64xf32> -> vector<16x64xf32>
    %24 = vector.broadcast %1 : vector<16x1xf32> to vector<16x64xf32>
    %25 = arith.mulf %24, %23 : vector<16x64xf32>
    %cst_13 = arith.constant 0.000000e+00 : f32
    %26 = vector.broadcast %cst_13 : f32 to vector<16x64xf32>
    %27 = arith.maximumf %25, %26 : vector<16x64xf32>
    %28 = arith.truncf %27 : vector<16x64xf32> to vector<16x64xbf16>
    %cst_14 = arith.constant dense<0.000000e+00> : vector<16x128xf32>
    %29 = tpu.matmul %28, %6, %cst_14 {dimension_numbers = #tpu.dot_dimension_numbers<[1], [0], [0], [1], [0, 0, 1, 1], [], []>} : vector<16x64xbf16>, vector<64x128xbf16>, vector<16x128xf32> -> vector<16x128xf32>
    %30 = vector.broadcast %1 : vector<16x1xf32> to vector<16x128xf32>
    %31 = arith.mulf %30, %29 : vector<16x128xf32>
    %32 = arith.truncf %31 : vector<16x128xf32> to vector<16x128xbf16>
    %c0_15 = arith.constant 0 : index
    %c0_16 = arith.constant 0 : index
    %33 = vector.load %arg3[%c0_15, %c0_16] : memref<2x16xbf16, #tpu.memory_space<vmem>>, vector<2x16xbf16>
    %cst_17 = arith.constant dense<0.000000e+00> : vector<2x16xf32>
    %34 = tpu.matmul %33, %0, %cst_17 {dimension_numbers = #tpu.dot_dimension_numbers<[1], [0], [0], [1], [0, 0, 1, 1], [], []>} : vector<2x16xbf16>, vector<16x16xbf16>, vector<2x16xf32> -> vector<2x16xf32>
    %35 = arith.truncf %34 : vector<2x16xf32> to vector<2x16xbf16>
    %cst_18 = arith.constant dense<0.000000e+00> : vector<2x128xf32>
    %36 = tpu.matmul %35, %32, %cst_18 {dimension_numbers = #tpu.dot_dimension_numbers<[1], [0], [0], [1], [0, 0, 1, 1], [], []>} : vector<2x16xbf16>, vector<16x128xbf16>, vector<2x128xf32> -> vector<2x128xf32>
    %37 = vector.broadcast %8 : vector<1x128xf32> to vector<2x128xf32>
    %38 = arith.addf %36, %37 : vector<2x128xf32>
    %c0_19 = arith.constant 0 : index
    %c0_20 = arith.constant 0 : index
    %39 = vector.load %arg5[%c0_19, %c0_20] : memref<2x128xf32, #tpu.memory_space<vmem>>, vector<2x128xf32>
    tpu.vector_store %arg5[%c0_19, %c0_20], %38 {strides = array<i32>} : memref<2x128xf32, #tpu.memory_space<vmem>>, vector<2x128xf32>,
    return
  }
  func.func @transform_0(%arg0: i32) -> (i32, i32) {
    %c0_i32 = arith.constant 0 : i32
    %c0_i32_0 = arith.constant 0 : i32
    %c0_i32_1 = arith.constant 0 : i32
    return %c0_i32, %c0_i32_0 : i32, i32
  }
  func.func @transform_1(%arg0: i32) -> (i32, i32) {
    %c0_i32 = arith.constant 0 : i32
    %c0_i32_0 = arith.constant 0 : i32
    %c0_i32_1 = arith.constant 0 : i32
    return %c0_i32, %c0_i32_0 : i32, i32
  }
  func.func @transform_2(%arg0: i32) -> (i32, i32) {
    %c0_i32 = arith.constant 0 : i32
    %c0_i32_0 = arith.constant 0 : i32
    %c0_i32_1 = arith.constant 0 : i32
    return %c0_i32, %c0_i32_0 : i32, i32
  }
  func.func @transform_3(%arg0: i32) -> (i32, i32) {
    %c0_i32 = arith.constant 0 : i32
    %c0_i32_0 = arith.constant 0 : i32
    %c0_i32_1 = arith.constant 0 : i32
    return %c0_i32, %c0_i32_0 : i32, i32
  }
  func.func @transform_4(%arg0: i32) -> (i32, i32) {
    %c0_i32 = arith.constant 0 : i32
    %c0_i32_0 = arith.constant 0 : i32
    %c0_i32_1 = arith.constant 0 : i32
    return %c0_i32, %c0_i32_0 : i32, i32
  }
}

</mosaic_0001>

<llo_original>
// kernel: tpu_custom_call.1
$region0: #{tpu_custom_call.1}
  #allocation0 [shape = 'u32[]', space=smem, size = 0x4, offset = 0x4, fixed_abs, tag = 'smem constant byte address 0x4 - core index']
  #allocation1 [shape = 'u32[144,128]{1,0:T(1,128)}', space=vmem, size = 0x12000, scoped, tag = 'internal scratch']
  %s0 = inlined_call_operand.hbm [shape: bf16[16,16], index: 0, kind: input, shape index: {}]
  %s1 = inlined_call_operand.hbm [shape: f32[16,9], index: 1, kind: input, shape index: {}]
  %s2 = inlined_call_operand.vmem [shape: bf16[2,16], index: 2, kind: input, shape index: {}]
  %s3 = inlined_call_operand.hbm [shape: bf16[160,128], index: 3, kind: input, shape index: {}]
  %s4 = inlined_call_operand.hbm [shape: f32[2,128], index: 4, kind: output, shape index: {}]
  %s5 = sld [smem:[#allocation0]]
  $region38: #{tpu_custom_call.1} parent=0
    _
  %s7 = ssub.s32 1, %s5
  %s8 = scalar_select 0, %s7, %s5
  $region1: #{tpu_custom_call.1} parent=0
    #allocation2 [shape = 'u8[4096]{0}', space=vmem, size = 0x1000, scoped, tag = 'input window, operand 0, single buffered']
    #allocation3 [shape = 's32[1]{0}', space=sflag, size = 0x4, scoped, tag = 'scoped memory for tpu_custom_call.1']
    #allocation4 [shape = 's32[1]{0}', space=sflag, size = 0x4, scoped, tag = 'scoped memory for tpu_custom_call.1']
    #allocation5 [shape = 'u8[8192]{0}', space=vmem, size = 0x2000, scoped, tag = 'input window, operand 1, single buffered']
    #allocation6 [shape = 's32[1]{0}', space=sflag, size = 0x4, scoped, tag = 'scoped memory for tpu_custom_call.1']
    #allocation7 [shape = 'u8[40960]{0}', space=vmem, size = 0xa000, scoped, tag = 'input window, operand 3, single buffered']
    #allocation8 [shape = 'u8[1024]{0}', space=vmem, size = 0x400, scoped, tag = 'output window, operand 0, single buffered']
    %9 = vsyncpa [#allocation3], 0
    %10 = vsyncpa [#allocation6], 0
    %11 = vsyncpa [#allocation4], 0
    // Predicated region
    $region2: #{tpu_custom_call.1} parent=1 // pred_check
      _
    $region3: #{tpu_custom_call.1} parent=1 // pred_check_branch
      %13 = sbr.rel (0) target = $region5
    $region4: #{tpu_custom_call.1} parent=1 // pred_region
      %s15 = ssub.s32 128, 128
      %16 = vsyncadd [#allocation3], %s15
      %s17 = sshll.u32 [#allocation2], 4
      %s18 = int_to_ptr.vmem [resolvable:$true] %s17
      %23 = dma.hbm_to_vmem [thread:$0]  %s0, 128, %s18, [#allocation3], 64, 64, 4
    $region5: #{tpu_custom_call.1} parent=1 // pred_fallthru
      _
    // Predicated region
    $region6: #{tpu_custom_call.1} parent=1 // pred_check
      _
    $region7: #{tpu_custom_call.1} parent=1 // pred_check_branch
      %25 = sbr.rel (0) target = $region9
    $region8: #{tpu_custom_call.1} parent=1 // pred_region
      %s27 = ssub.s32 256, 256
      %28 = vsyncadd [#allocation6], %s27
      %s29 = sshll.u32 [#allocation5], 4
      %s30 = int_to_ptr.vmem [resolvable:$true] %s29
      %35 = dma.hbm_to_vmem [thread:$0]  %s1, 256, %s30, [#allocation6], 128, 128, 8
    $region9: #{tpu_custom_call.1} parent=1 // pred_fallthru
      _
    // Predicated region
    $region10: #{tpu_custom_call.1} parent=1 // pred_check
      _
    $region11: #{tpu_custom_call.1} parent=1 // pred_check_branch
      %37 = sbr.rel (0) target = $region13
    $region12: #{tpu_custom_call.1} parent=1 // pred_region
      _
    $region13: #{tpu_custom_call.1} parent=1 // pred_fallthru
      _
    // Predicated region
    $region14: #{tpu_custom_call.1} parent=1 // pred_check
      _
    $region15: #{tpu_custom_call.1} parent=1 // pred_check_branch
      %39 = sbr.rel (0) target = $region17
    $region16: #{tpu_custom_call.1} parent=1 // pred_region
      %s41 = ssub.s32 1280, 1280
      %42 = vsyncadd [#allocation6], %s41
      %s43 = sshll.u32 [#allocation7], 4
      %s44 = int_to_ptr.vmem [resolvable:$true] %s43
      %49 = dma.hbm_to_vmem [thread:$0]  %s3, 1280, %s44, [#allocation6], 64, 64, 4
    $region17: #{tpu_custom_call.1} parent=1 // pred_fallthru
      _
    // Predicated region
    $region18: #{tpu_custom_call.1} parent=1 // pred_check
      _
    $region19: #{tpu_custom_call.1} parent=1 // pred_check_branch
      %51 = sbr.rel (0) target = $region21
    $region20: #{tpu_custom_call.1} parent=1 // pred_region
      %52 = dma.done [#allocation3], 128
    $region21: #{tpu_custom_call.1} parent=1 // pred_fallthru
      _
    // Predicated region
    $region22: #{tpu_custom_call.1} parent=1 // pred_check
      _
    $region23: #{tpu_custom_call.1} parent=1 // pred_check_branch
      %54 = sbr.rel (0) target = $region25
    $region24: #{tpu_custom_call.1} parent=1 // pred_region
      %55 = dma.done [#allocation6], 256
    $region25: #{tpu_custom_call.1} parent=1 // pred_fallthru
      _
    // Predicated region
    $region26: #{tpu_custom_call.1} parent=1 // pred_check
      _
    $region27: #{tpu_custom_call.1} parent=1 // pred_check_branch
      %57 = sbr.rel (0) target = $region29
    $region28: #{tpu_custom_call.1} parent=1 // pred_region
      %58 = dma.done [#allocation6], 1280
    $region29: #{tpu_custom_call.1} parent=1 // pred_fallthru
      _
    %v60 = vld [vmem:[#allocation2] sm:$0xf]
    %v61 = vld [vmem:[#allocation2 + $0x4] sm:$0xf]
    %v62 = vld [vmem:[#allocation5] sm:$0xff]
    %v63 = vld [vmem:[#allocation5 + $0x8] sm:$0xff]
    %v64 = vpack.c.bf16 %v63, %v62
    %v65 = vld [vmem:[#allocation7] sm:$0xf]
    %v66 = vld [vmem:[#allocation7 + $0x8] sm:$0xf]
    %v67 = vld [vmem:[#allocation7 + $0xc] sm:$0xf]
    %v68 = vld [vmem:[#allocation7 + $0x10] sm:$0xf]
    %v69 = vld [vmem:[#allocation7 + $0x14] sm:$0xf]
    %v70 = vld [vmem:[#allocation7 + $0x18] sm:$0xf]
    %v71 = vld [vmem:[#allocation7 + $0x1c] sm:$0xf]
    %v72 = vld [vmem:[#allocation7 + $0x20] sm:$0xf]
    %v73 = vld [vmem:[#allocation7 + $0x24] sm:$0xf]
    %v74 = vld [vmem:[#allocation7 + $0x28] sm:$0xf]
    %v75 = vld [vmem:[#allocation7 + $0x2c] sm:$0xf]
    %v76 = vld [vmem:[#allocation7 + $0x30] sm:$0xf]
    %v77 = vld [vmem:[#allocation7 + $0x34] sm:$0xf]
    %v78 = vld [vmem:[#allocation7 + $0x38] sm:$0xf]
    %v79 = vld [vmem:[#allocation7 + $0x3c] sm:$0xf]
    %v80 = vld [vmem:[#allocation7 + $0x40] sm:$0xf]
    %v81 = vld [vmem:[#allocation7 + $0x44] sm:$0xf]
    %v82 = vld [vmem:[#allocation7 + $0x48] sm:$0x1]
    %v83 = vunpack.c.l.bf16 %v82
    %85 = vrot.lane.b32.xlu0 %v64, 127
    %v86 = vpop.permute.xlu0 %85
    %vm87 = vcmask 64512
    %v89 = vsel %vm87, %v86, 0
    %vm91 = vcmask 1043456
    %v93 = vsel %vm91, %v65, 0
    %95 = vmatprep.subr.bf16.mxu0 0
    %96 = vmatpush1.bf16.msra.mxu0 %v93
    %97 = vmatprep.subr.bf16.mxu0 0
    %98 = vmatpush1.bf16.msra.mxu0 0
    %99 = vmatprep.subr.bf16.mxu0 0
    %100 = vmatpush1.bf16.msra.mxu0 0
    %101 = vmatprep.subr.bf16.mxu0 0
    %102 = vmatpush1.bf16.msra.mxu0 0
    %103 = vmatprep.subr.bf16.mxu0 0
    %104 = vmatpush1.bf16.msra.mxu0 0
    %105 = vmatprep.subr.bf16.mxu0 0
    %106 = vmatpush1.bf16.msra.mxu0 0
    %107 = vmatprep.subr.bf16.mxu0 0
    %108 = vmatpush1.bf16.msra.mxu0 0
    %109 = vmatprep.subr.bf16.mxu0 0
    %110 = vmatpush1.bf16.msra.mxu0 0
    %111 = vmatprep.subr.bf16.mxu0 0
    %112 = vmatpush1.bf16.msra.mxu0 0
    %113 = vmatprep.subr.bf16.mxu0 0
    %114 = vmatpush1.bf16.msra.mxu0 0
    %115 = vmatprep.subr.bf16.mxu0 0
    %116 = vmatpush1.bf16.msra.mxu0 0
    %117 = vmatprep.subr.bf16.mxu0 0
    %118 = vmatpush1.bf16.msra.mxu0 0
    %119 = vmatprep.subr.bf16.mxu0 0
    %120 = vmatpush1.bf16.msra.mxu0 0
    %121 = vmatprep.subr.bf16.mxu0 0
    %122 = vmatpush1.bf16.msra.mxu0 0
    %123 = vmatprep.subr.bf16.mxu0 0
    %124 = vmatpush1.bf16.msra.mxu0 0
    %125 = vmatprep.subr.bf16.mxu0 0
    %126 = vmatpush1.bf16.msra.mxu0 0
    %127 = vmatprep.mubr.bf16.mxu0 0
    %128 = vmatmul.mubr.bf16.gmra.mrb[0].mxu0 %v89
    %v129 = vpop.f32.mrb[0].mxu0
    %v130 = vadd.f32 0.0, %v129
    %v131 = vpop.f32.mrb[0].mxu0
    %v132 = vpop.f32.mrb[0].mxu0
    %v133 = vadd.f32 0.0, %v132
    %v134 = vpop.f32.mrb[0].mxu0
    %135 = vdwg.mxu0
    %137 = vset.pattern.permute.xlu0 0
    %138 = vperm.xlu0 %137, %v62
    %v139 = vpop.permute.xlu0 %138
    %142 = vset.pattern.permute.xlu0 0
    %143 = vperm.xlu0 %142, %v63
    %v144 = vpop.permute.xlu0 %143
    %v146 = vmul.f32 %v139, %v130
    %v147 = vmul.f32 %v144, %v133
    %v148 = vpack.c.bf16 %v147, %v146
    %v151 = vunpack.c.l.b16 %v60
    %v152 = vunpack.c.l.b16 %v61
    %v153 = vpack.c.b16 %v152, %v151
    %vm154 = vcmask 130048
    %v156 = vsel %vm154, %v153, 0
    %158 = vmatprep.subr.bf16.mxu0 0
    %159 = vmatpush1.bf16.msra.mxu0 %v148
    %160 = vmatprep.subr.bf16.mxu0 0
    %161 = vmatpush1.bf16.msra.mxu0 0
    %162 = vmatprep.subr.bf16.mxu0 0
    %163 = vmatpush1.bf16.msra.mxu0 0
    %164 = vmatprep.subr.bf16.mxu0 0
    %165 = vmatpush1.bf16.msra.mxu0 0
    %166 = vmatprep.subr.bf16.mxu0 0
    %167 = vmatpush1.bf16.msra.mxu0 0
    %168 = vmatprep.subr.bf16.mxu0 0
    %169 = vmatpush1.bf16.msra.mxu0 0
    %170 = vmatprep.subr.bf16.mxu0 0
    %171 = vmatpush1.bf16.msra.mxu0 0
    %172 = vmatprep.subr.bf16.mxu0 0
    %173 = vmatpush1.bf16.msra.mxu0 0
    %174 = vmatprep.subr.bf16.mxu0 0
    %175 = vmatpush1.bf16.msra.mxu0 0
    %176 = vmatprep.subr.bf16.mxu0 0
    %177 = vmatpush1.bf16.msra.mxu0 0
    %178 = vmatprep.subr.bf16.mxu0 0
    %179 = vmatpush1.bf16.msra.mxu0 0
    %180 = vmatprep.subr.bf16.mxu0 0
    %181 = vmatpush1.bf16.msra.mxu0 0
    %182 = vmatprep.subr.bf16.mxu0 0
    %183 = vmatpush1.bf16.msra.mxu0 0
    %184 = vmatprep.subr.bf16.mxu0 0
    %185 = vmatpush1.bf16.msra.mxu0 0
    %186 = vmatprep.subr.bf16.mxu0 0
    %187 = vmatpush1.bf16.msra.mxu0 0
    %188 = vmatprep.subr.bf16.mxu0 0
    %189 = vmatpush1.bf16.msra.mxu0 0
    %190 = vmatprep.mubr.bf16.mxu0 0
    %191 = vmatmul.mubr.bf16.gmra.mrb[0].mxu0 %v156
    %v192 = vpop.f32.mrb[0].mxu0
    %v193 = vadd.f32 0.0, %v192
    %v194 = vpop.f32.mrb[0].mxu0
    %v195 = vpop.f32.mrb[0].mxu0
    %v196 = vadd.f32 0.0, %v195
    %v197 = vpop.f32.mrb[0].mxu0
    %198 = vdwg.mxu0
    %v199 = vmul.f32 %v139, %v193
    %v200 = vmul.f32 %v144, %v196
    %v201 = vmax.f32 %v199, 0.0
    %v202 = vmax.f32 %v200, 0.0
    %v203 = vpack.c.bf16 %v202, %v201
    %v212 = vunpack.c.l.b16 %v66
    %v213 = vunpack.c.l.b16 %v67
    %v214 = vunpack.c.l.b16 %v68
    %v215 = vunpack.c.l.b16 %v69
    %v216 = vunpack.c.l.b16 %v70
    %v217 = vunpack.c.l.b16 %v71
    %v218 = vunpack.c.l.b16 %v72
    %v219 = vunpack.c.l.b16 %v73
    %v220 = vpack.c.b16 %v213, %v212
    %v221 = vpack.c.b16 %v215, %v214
    %v222 = vpack.c.b16 %v217, %v216
    %v223 = vpack.c.b16 %v219, %v218
    %vm228 = vcmask 523264
    %v230 = vsel %vm228, %v203, 0
    %232 = vmatprep.subr.bf16.mxu0 0
    %233 = vmatpush1.bf16.msra.mxu0 %v220
    %234 = vmatprep.subr.bf16.mxu0 0
    %235 = vmatpush1.bf16.msra.mxu0 %v221
    %236 = vmatprep.subr.bf16.mxu0 0
    %237 = vmatpush1.bf16.msra.mxu0 %v222
    %238 = vmatprep.subr.bf16.mxu0 0
    %239 = vmatpush1.bf16.msra.mxu0 %v223
    %240 = vmatprep.subr.bf16.mxu0 0
    %241 = vmatpush1.bf16.msra.mxu0 0
    %242 = vmatprep.subr.bf16.mxu0 0
    %243 = vmatpush1.bf16.msra.mxu0 0
    %244 = vmatprep.subr.bf16.mxu0 0
    %245 = vmatpush1.bf16.msra.mxu0 0
    %246 = vmatprep.subr.bf16.mxu0 0
    %247 = vmatpush1.bf16.msra.mxu0 0
    %248 = vmatprep.subr.bf16.mxu0 0
    %249 = vmatpush1.bf16.msra.mxu0 0
    %250 = vmatprep.subr.bf16.mxu0 0
    %251 = vmatpush1.bf16.msra.mxu0 0
    %252 = vmatprep.subr.bf16.mxu0 0
    %253 = vmatpush1.bf16.msra.mxu0 0
    %254 = vmatprep.subr.bf16.mxu0 0
    %255 = vmatpush1.bf16.msra.mxu0 0
    %256 = vmatprep.subr.bf16.mxu0 0
    %257 = vmatpush1.bf16.msra.mxu0 0
    %258 = vmatprep.subr.bf16.mxu0 0
    %259 = vmatpush1.bf16.msra.mxu0 0
    %260 = vmatprep.subr.bf16.mxu0 0
    %261 = vmatpush1.bf16.msra.mxu0 0
    %262 = vmatprep.subr.bf16.mxu0 0
    %263 = vmatpush1.bf16.msra.mxu0 0
    %264 = vmatprep.mubr.bf16.mxu0 0
    %265 = vmatmul.mubr.bf16.gmra.mrb[0].mxu0 %v230
    %v266 = vpop.f32.mrb[0].mxu0
    %v267 = vadd.f32 0.0, %v266
    %v268 = vpop.f32.mrb[0].mxu0
    %v269 = vpop.f32.mrb[0].mxu0
    %v270 = vadd.f32 0.0, %v269
    %v271 = vpop.f32.mrb[0].mxu0
    %272 = vdwg.mxu0
    %v273 = vmul.f32 %v139, %v267
    %v274 = vmul.f32 %v144, %v270
    %v275 = vpack.c.bf16 %v274, %v273
    %276 = vmatprep.subr.bf16.mxu0 0
    %277 = vmatpush1.bf16.msra.mxu0 %v275
    %278 = vmatprep.subr.bf16.mxu0 0
    %279 = vmatpush1.bf16.msra.mxu0 0
    %280 = vmatprep.subr.bf16.mxu0 0
    %281 = vmatpush1.bf16.msra.mxu0 0
    %282 = vmatprep.subr.bf16.mxu0 0
    %283 = vmatpush1.bf16.msra.mxu0 0
    %284 = vmatprep.subr.bf16.mxu0 0
    %285 = vmatpush1.bf16.msra.mxu0 0
    %286 = vmatprep.subr.bf16.mxu0 0
    %287 = vmatpush1.bf16.msra.mxu0 0
    %288 = vmatprep.subr.bf16.mxu0 0
    %289 = vmatpush1.bf16.msra.mxu0 0
    %290 = vmatprep.subr.bf16.mxu0 0
    %291 = vmatpush1.bf16.msra.mxu0 0
    %292 = vmatprep.subr.bf16.mxu0 0
    %293 = vmatpush1.bf16.msra.mxu0 0
    %294 = vmatprep.subr.bf16.mxu0 0
    %295 = vmatpush1.bf16.msra.mxu0 0
    %296 = vmatprep.subr.bf16.mxu0 0
    %297 = vmatpush1.bf16.msra.mxu0 0
    %298 = vmatprep.subr.bf16.mxu0 0
    %299 = vmatpush1.bf16.msra.mxu0 0
    %300 = vmatprep.subr.bf16.mxu0 0
    %301 = vmatpush1.bf16.msra.mxu0 0
    %302 = vmatprep.subr.bf16.mxu0 0
    %303 = vmatpush1.bf16.msra.mxu0 0
    %304 = vmatprep.subr.bf16.mxu0 0
    %305 = vmatpush1.bf16.msra.mxu0 0
    %306 = vmatprep.subr.bf16.mxu0 0
    %307 = vmatpush1.bf16.msra.mxu0 0
    %308 = vmatprep.mubr.bf16.mxu0 0
    %309 = vmatmul.mubr.bf16.gmra.mrb[0].mxu0 %v156
    %v310 = vpop.f32.mrb[0].mxu0
    %v311 = vadd.f32 0.0, %v310
    %v312 = vpop.f32.mrb[0].mxu0
    %v313 = vpop.f32.mrb[0].mxu0
    %v314 = vadd.f32 0.0, %v313
    %v315 = vpop.f32.mrb[0].mxu0
    %316 = vdwg.mxu0
    %v317 = vmul.f32 %v139, %v311
    %v318 = vmul.f32 %v144, %v314
    %v319 = vmax.f32 %v317, 0.0
    %v320 = vmax.f32 %v318, 0.0
    %v321 = vpack.c.bf16 %v320, %v319
    %v330 = vunpack.c.l.b16 %v74
    %v331 = vunpack.c.l.b16 %v75
    %v332 = vunpack.c.l.b16 %v76
    %v333 = vunpack.c.l.b16 %v77
    %v334 = vunpack.c.l.b16 %v78
    %v335 = vunpack.c.l.b16 %v79
    %v336 = vunpack.c.l.b16 %v80
    %v337 = vunpack.c.l.b16 %v81
    %v338 = vpack.c.b16 %v331, %v330
    %v339 = vpack.c.b16 %v333, %v332
    %v340 = vpack.c.b16 %v335, %v334
    %v341 = vpack.c.b16 %v337, %v336
    %v347 = vsel %vm228, %v321, 0
    %349 = vmatprep.subr.bf16.mxu0 0
    %350 = vmatpush1.bf16.msra.mxu0 %v338
    %351 = vmatprep.subr.bf16.mxu0 0
    %352 = vmatpush1.bf16.msra.mxu0 %v339
    %353 = vmatprep.subr.bf16.mxu0 0
    %354 = vmatpush1.bf16.msra.mxu0 %v340
    %355 = vmatprep.subr.bf16.mxu0 0
    %356 = vmatpush1.bf16.msra.mxu0 %v341
    %357 = vmatprep.subr.bf16.mxu0 0
    %358 = vmatpush1.bf16.msra.mxu0 0
    %359 = vmatprep.subr.bf16.mxu0 0
    %360 = vmatpush1.bf16.msra.mxu0 0
    %361 = vmatprep.subr.bf16.mxu0 0
    %362 = vmatpush1.bf16.msra.mxu0 0
    %363 = vmatprep.subr.bf16.mxu0 0
    %364 = vmatpush1.bf16.msra.mxu0 0
    %365 = vmatprep.subr.bf16.mxu0 0
    %366 = vmatpush1.bf16.msra.mxu0 0
    %367 = vmatprep.subr.bf16.mxu0 0
    %368 = vmatpush1.bf16.msra.mxu0 0
    %369 = vmatprep.subr.bf16.mxu0 0
    %370 = vmatpush1.bf16.msra.mxu0 0
    %371 = vmatprep.subr.bf16.mxu0 0
    %372 = vmatpush1.bf16.msra.mxu0 0
    %373 = vmatprep.subr.bf16.mxu0 0
    %374 = vmatpush1.bf16.msra.mxu0 0
    %375 = vmatprep.subr.bf16.mxu0 0
    %376 = vmatpush1.bf16.msra.mxu0 0
    %377 = vmatprep.subr.bf16.mxu0 0
    %378 = vmatpush1.bf16.msra.mxu0 0
    %379 = vmatprep.subr.bf16.mxu0 0
    %380 = vmatpush1.bf16.msra.mxu0 0
    %381 = vmatprep.mubr.bf16.mxu0 0
    %382 = vmatmul.mubr.bf16.gmra.mrb[0].mxu0 %v347
    %v383 = vpop.f32.mrb[0].mxu0
    %v384 = vadd.f32 0.0, %v383
    %v385 = vpop.f32.mrb[0].mxu0
    %v386 = vpop.f32.mrb[0].mxu0
    %v387 = vadd.f32 0.0, %v386
    %v388 = vpop.f32.mrb[0].mxu0
    %389 = vdwg.mxu0
    %v390 = vmul.f32 %v139, %v384
    %v391 = vmul.f32 %v144, %v387
    %v392 = vpack.c.bf16 %v391, %v390
    %v393 = vld [vmem:[%s2] sm:$0x1]
    %v396 = vsel %vm154, %v393, 0
    %398 = vmatprep.subr.bf16.mxu0 0
    %399 = vmatpush1.bf16.msra.mxu0 %v153
    %400 = vmatprep.subr.bf16.mxu0 0
    %401 = vmatpush1.bf16.msra.mxu0 0
    %402 = vmatprep.subr.bf16.mxu0 0
    %403 = vmatpush1.bf16.msra.mxu0 0
    %404 = vmatprep.subr.bf16.mxu0 0
    %405 = vmatpush1.bf16.msra.mxu0 0
    %406 = vmatprep.subr.bf16.mxu0 0
    %407 = vmatpush1.bf16.msra.mxu0 0
    %408 = vmatprep.subr.bf16.mxu0 0
    %409 = vmatpush1.bf16.msra.mxu0 0
    %410 = vmatprep.subr.bf16.mxu0 0
    %411 = vmatpush1.bf16.msra.mxu0 0
    %412 = vmatprep.subr.bf16.mxu0 0
    %413 = vmatpush1.bf16.msra.mxu0 0
    %414 = vmatprep.subr.bf16.mxu0 0
    %415 = vmatpush1.bf16.msra.mxu0 0
    %416 = vmatprep.subr.bf16.mxu0 0
    %417 = vmatpush1.bf16.msra.mxu0 0
    %418 = vmatprep.subr.bf16.mxu0 0
    %419 = vmatpush1.bf16.msra.mxu0 0
    %420 = vmatprep.subr.bf16.mxu0 0
    %421 = vmatpush1.bf16.msra.mxu0 0
    %422 = vmatprep.subr.bf16.mxu0 0
    %423 = vmatpush1.bf16.msra.mxu0 0
    %424 = vmatprep.subr.bf16.mxu0 0
    %425 = vmatpush1.bf16.msra.mxu0 0
    %426 = vmatprep.subr.bf16.mxu0 0
    %427 = vmatpush1.bf16.msra.mxu0 0
    %428 = vmatprep.subr.bf16.mxu0 0
    %429 = vmatpush1.bf16.msra.mxu0 0
    %430 = vmatprep.mubr.bf16.mxu0 0
    %431 = vmatmul.mubr.bf16.gmra.mrb[0].mxu0 %v396
    %v432 = vpop.f32.mrb[0].mxu0
    %v433 = vadd.f32 0.0, %v432
    %v434 = vpop.f32.mrb[0].mxu0
    %v435 = vpop.f32.mrb[0].mxu0
    %v436 = vpop.f32.mrb[0].mxu0
    %437 = vdwg.mxu0
    %v438 = vpack.c.bf16 %v433, %v433
    %v439 = vlaneseq
    %v440 = vshrl.u32 %v439, 7
    %v441 = vsub.s32 0, %v440
    %v442 = vrot.slane %v83, %v441
    %v444 = vsel %vm154, %v438, 0
    %446 = vmatprep.subr.bf16.mxu0 0
    %447 = vmatpush1.bf16.msra.mxu0 %v392
    %448 = vmatprep.subr.bf16.mxu0 0
    %449 = vmatpush1.bf16.msra.mxu0 0
    %450 = vmatprep.subr.bf16.mxu0 0
    %451 = vmatpush1.bf16.msra.mxu0 0
    %452 = vmatprep.subr.bf16.mxu0 0
    %453 = vmatpush1.bf16.msra.mxu0 0
    %454 = vmatprep.subr.bf16.mxu0 0
    %455 = vmatpush1.bf16.msra.mxu0 0
    %456 = vmatprep.subr.bf16.mxu0 0
    %457 = vmatpush1.bf16.msra.mxu0 0
    %458 = vmatprep.subr.bf16.mxu0 0
    %459 = vmatpush1.bf16.msra.mxu0 0
    %460 = vmatprep.subr.bf16.mxu0 0
    %461 = vmatpush1.bf16.msra.mxu0 0
    %462 = vmatprep.subr.bf16.mxu0 0
    %463 = vmatpush1.bf16.msra.mxu0 0
    %464 = vmatprep.subr.bf16.mxu0 0
    %465 = vmatpush1.bf16.msra.mxu0 0
    %466 = vmatprep.subr.bf16.mxu0 0
    %467 = vmatpush1.bf16.msra.mxu0 0
    %468 = vmatprep.subr.bf16.mxu0 0
    %469 = vmatpush1.bf16.msra.mxu0 0
    %470 = vmatprep.subr.bf16.mxu0 0
    %471 = vmatpush1.bf16.msra.mxu0 0
    %472 = vmatprep.subr.bf16.mxu0 0
    %473 = vmatpush1.bf16.msra.mxu0 0
    %474 = vmatprep.subr.bf16.mxu0 0
    %475 = vmatpush1.bf16.msra.mxu0 0
    %476 = vmatprep.subr.bf16.mxu0 0
    %477 = vmatpush1.bf16.msra.mxu0 0
    %478 = vmatprep.mubr.bf16.mxu0 0
    %479 = vmatmul.mubr.bf16.gmra.mrb[0].mxu0 %v444
    %v480 = vpop.f32.mrb[0].mxu0
    %v481 = vadd.f32 %v442, %v480
    %v482 = vpop.f32.mrb[0].mxu0
    %v483 = vpop.f32.mrb[0].mxu0
    %v484 = vpop.f32.mrb[0].mxu0
    %485 = vdwg.mxu0
    %486 = vst [vmem:[#allocation8] sm:$0x3] %v481
    // Predicated region
    $region30: #{tpu_custom_call.1} parent=1 // pred_check
      _
    $region31: #{tpu_custom_call.1} parent=1 // pred_check_branch
      %488 = sbr.rel (0) target = $region33
    $region32: #{tpu_custom_call.1} parent=1 // pred_region
      %s490 = ssub.s32 32, 32
      %491 = vsyncadd [#allocation4], %s490
      %s493 = sshll.u32 [#allocation8], 4
      %s494 = int_to_ptr.vmem [resolvable:$true] %s493
      %496 = dma.vmem_to_hbm [thread:$0]  %s494, 32, %s4, [#allocation4]
    $region33: #{tpu_custom_call.1} parent=1 // pred_fallthru
      _
    // Predicated region
    $region34: #{tpu_custom_call.1} parent=1 // pred_check
      _
    $region35: #{tpu_custom_call.1} parent=1 // pred_check_branch
      %498 = sbr.rel (0) target = $region37
    $region36: #{tpu_custom_call.1} parent=1 // pred_region
      %499 = dma.done [#allocation4], 32
    $region37: #{tpu_custom_call.1} parent=1 // pred_fallthru
      _
    %500 = vsyncpa [#allocation3], 1
    %501 = vsyncpa [#allocation6], 1
    %502 = vsyncpa [#allocation4], 1

</llo_original>
